<compile_context>
chip_gen: v6e
topology: v6e:2x2x1
jax: 0.10.0
libtpu: 0.0.40
codegen_flags: <defaults>
</compile_context>

<pallas_src>
import jax
import jax.numpy as jnp
import numpy as np
from jax.experimental import pallas as pl
from jax.experimental.pallas import tpu as pltpu

# ----------------------------- model config ---------------------------------
TRACE_LENGTH = 16
ENCODING_DIM = 8
KERNEL_SIZES = (3, 3)
STRIDES = (2, 2)
CONV_CHANNELS = (4, 8, 16)   # [in, hidden, out] channels
BATCH = 2


# -------------- host-side (once per parameter set) preprocessing -------------
def _conv_pool_parity_matrix(w, l_in, l_out, stride, parity):
    """Fold Conv1d(stride=1, padding=K//2) + element `parity` of each
    MaxPool1d(stride, stride) window into one dense (l_in*Ci, l_out*Co) matrix.

    Acting on a position-major/channel-minor flattened activation
    h[b, i*Ci + ci], `h @ M` yields the (pre-bias) conv output at positions
    stride*j + parity, flattened as [b, j*Co + co].  Edge zero-padding is baked
    in as absent (zero) blocks.  Pure weight re-arrangement (numpy, host-side).
    """
    co_, ci_, k_ = w.shape
    pad = k_ // 2
    wt = np.transpose(w, (2, 1, 0)).astype(np.float32)        # (K, Ci, Co)
    m = np.zeros((l_in * ci_, l_out * co_), np.float32)
    for j in range(l_out):                                    # static, tiny
        pos = stride * j + parity                             # conv output pos
        for k in range(k_):
            i = pos + k - pad                                 # input position
            if 0 <= i < l_in:
                m[i * ci_:(i + 1) * ci_, j * co_:(j + 1) * co_] = wt[k]
    return m


def preprocess_params(params):
    """Pack all ConvEncoder parameters into two kernel-ready slabs.

    HOST-side numpy, run once per parameter set -- deliberately kept OUT of the
    per-call jitted path (the single largest wall-clock win from the review).

    Returns:
      w_pack: (n_conv+1, D, W) bfloat16.
              Conv layer i -> [M_parity0 | M_parity1 | ...] (all pooling
              parities side by side, so the whole conv+pool layer is ONE wide
              matmul).  Last slab = Flatten+Linear head with columns permuted
              from PyTorch's channel-major flatten to the position-major lane
              layout.  The FIRST conv slab's rows are permuted so the kernel
              consumes x.reshape(B, C0*L0) (channel-major) directly.
      b_pack: (n_conv+1, W) float32. Position-tiled conv biases + head bias.
    """
    conv_ws = [np.asarray(params["w1"], np.float32), np.asarray(params["w2"], np.float32)]
    conv_bs = [np.asarray(params["b1"], np.float32), np.asarray(params["b2"], np.float32)]
    wl = np.asarray(params["wl"], np.float32)
    bl = np.asarray(params["bl"], np.float32)
    e = wl.shape[0]

    chans = list(CONV_CHANNELS)
    lengths = [TRACE_LENGTH]
    for s in STRIDES:
        lengths.append(lengths[-1] // s)      # conv is "same" length, pool is floor(L/s)

    dims = [lengths[i] * chans[i] for i in range(len(chans))]
    d = max(max(dims), e)                     # packed activation lane width (=64 here)
    w_out = max(STRIDES) * d                  # packed layer-output width   (=128 here)

    slabs, biases = [], []
    for i, (cw, cb, s) in enumerate(zip(conv_ws, conv_bs, STRIDES)):
        l_in, l_out = lengths[i], lengths[i + 1]
        ci, co = chans[i], chans[i + 1]
        parts = []
        for parity in range(s):
            m = _conv_pool_parity_matrix(cw, l_in, l_out, s, parity)  # (l_in*ci, l_out*co)
            if i == 0:
                # rows: position-major (l*Ci + c) -> channel-major (c*L + l),
                # so no on-device transpose of x is needed.
                m = m.reshape(l_in, ci, -1).transpose(1, 0, 2).reshape(l_in * ci, -1)
            parts.append(np.pad(m, ((0, d - m.shape[0]), (0, d - m.shape[1]))))
        slab = np.concatenate(parts, axis=1)                          # (D, s*D)
        slabs.append(np.pad(slab, ((0, 0), (0, w_out - slab.shape[1]))))
        bias = np.tile(cb, l_out)                                     # position-major bias
        biases.append(np.pad(bias, (0, w_out - bias.shape[0])))

    # Flatten + Linear head (PyTorch flatten of (B, C_last, L_last) is channel-major).
    c_last, l_last = chans[-1], lengths[-1]
    wl_perm = wl.reshape(e, c_last, l_last).transpose(2, 1, 0).reshape(l_last * c_last, e)
    slabs.append(np.pad(wl_perm, ((0, d - wl_perm.shape[0]), (0, w_out - e))))
    biases.append(np.pad(bl, (0, w_out - e)))

    w_pack = jnp.asarray(np.stack(slabs), dtype=jnp.bfloat16)   # (3, 64, 128) ~48 KB
    b_pack = jnp.asarray(np.stack(biases), dtype=jnp.float32)   # (3, 128)
    return w_pack, b_pack


# --------------------------------- kernel ------------------------------------
def make_conv_encoder_kernel(parities, d):
    """parities: per-conv-layer pooling factor (== stride). Final Linear last."""
    n_conv = len(parities)

    def kernel(x_ref, w_ref, b_ref, out_ref):
        h = x_ref[...]                                            # (B, D) bf16
        for li, p in enumerate(parities):                         # static unroll
            # ONE wide matmul per conv layer: lanes [q*D, (q+1)*D) hold the
            # pre-bias conv outputs at pooled-window offset q.
            z = jnp.dot(h, w_ref[li], preferred_element_type=jnp.float32)   # (B, W) f32
            # MaxPool over window offsets: lane slices + VPU max (off the MXU path).
            m = z[:, :d]
            for q in range(1, p):
                m = jnp.maximum(m, z[:, q * d:(q + 1) * d])
            # bias + ReLU (commute with the pooling max); back to bf16 for the MXU.
            h = jnp.maximum(m + b_ref[li:li + 1, :d], 0.0).astype(jnp.bfloat16)
        # Flatten + Linear head: one matmul, full-width (lane-dense) unmasked store.
        o = jnp.dot(h, w_ref[n_conv], preferred_element_type=jnp.float32)
        out_ref[...] = o + b_ref[n_conv:n_conv + 1, :]

    return kernel


# --------------------------------- wrapper -----------------------------------
def conv_encoder_forward(x_ncl, w_pack, b_pack):
    """x_ncl: (B, C0, L0) float32 (PyTorch NCL). w_pack/b_pack from preprocess_params.
    Returns (B, ENCODING_DIM) float32."""
    b_ = x_ncl.shape[0]
    d, w_out = w_pack.shape[1], w_pack.shape[2]
    # Channel-major flatten (first slab rows are pre-permuted to accept it);
    # pad lanes to D and cast to bf16 for single-pass MXU matmuls.
    x_flat = x_ncl.reshape(b_, -1).astype(jnp.bfloat16)
    if x_flat.shape[1] < d:
        x_flat = jnp.pad(x_flat, ((0, 0), (0, d - x_flat.shape[1])))

    vmem = pl.BlockSpec(memory_space=pltpu.MemorySpace.VMEM)
    out = pl.pallas_call(
        make_conv_encoder_kernel(parities=STRIDES, d=d),
        out_shape=jax.ShapeDtypeStruct((b_, w_out), jnp.float32),
        in_specs=[vmem, vmem, vmem],
        out_specs=vmem,
    )(x_flat, w_pack, b_pack)
    return out[:, :ENCODING_DIM]     # kernel store stays lane-dense; slice outside


# ------------------------- pure-JAX reference (check) ------------------------
def reference_forward(x_ncl, params):
    h = x_ncl
    convs = ((params["w1"], params["b1"], STRIDES[0]),
             (params["w2"], params["b2"], STRIDES[1]))
    for w, b, s in convs:
        k = w.shape[2]
        pad = k // 2
        h = jax.lax.conv_general_dilated(
            h, w, window_strides=(1,), padding=[(pad, pad)],
            dimension_numbers=("NCH", "OIH", "NCH"))
        h = jnp.maximum(h + b[None, :, None], 0.0)
        bsz, ch, ln = h.shape
        lo = ln // s
        h = h[:, :, :lo * s].reshape(bsz, ch, lo, s).max(axis=-1)
    bsz = h.shape[0]
    flat = h.reshape(bsz, -1)                    # channel-major flatten (PyTorch)
    return flat @ params["wl"].T + params["bl"][None, :]


# ----------------------------------- main ------------------------------------
if __name__ == "__main__":
    key = jax.random.PRNGKey(0)
    ks = jax.random.split(key, 7)
    C0, C1, C2 = CONV_CHANNELS
    L2 = TRACE_LENGTH // (STRIDES[0] * STRIDES[1])
    linear_dim = C2 * L2

    params = {
        "w1": 0.1 * jax.random.normal(ks[0], (C1, C0, KERNEL_SIZES[0]), jnp.float32),
        "b1": 0.1 * jax.random.normal(ks[1], (C1,), jnp.float32),
        "w2": 0.1 * jax.random.normal(ks[2], (C2, C1, KERNEL_SIZES[1]), jnp.float32),
        "b2": 0.1 * jax.random.normal(ks[3], (C2,), jnp.float32),
        "wl": 0.1 * jax.random.normal(ks[4], (ENCODING_DIM, linear_dim), jnp.float32),
        "bl": 0.1 * jax.random.normal(ks[5], (ENCODING_DIM,), jnp.float32),
    }
    x = jax.random.normal(ks[6], (BATCH, C0, TRACE_LENGTH), jnp.float32)

    # Parameter packing runs ONCE on the host, outside the jitted per-call path.
    w_pack, b_pack = preprocess_params(params)

    fwd = jax.jit(conv_encoder_forward)
    out = jax.block_until_ready(fwd(x, w_pack, b_pack))

    ref = reference_forward(x, params)
    # bf16 matmul operands (f32 accumulation) vs the f32 XLA reference path.
    np.testing.assert_allclose(np.asarray(out), np.asarray(ref), rtol=2e-2, atol=2e-2)
    assert out.shape == (BATCH, ENCODING_DIM)
    print("KERNEL_OK")
</pallas_src>

<mosaic_0001>
module attributes {stable_mosaic.version = 11 : i64} {
  func.func @kernel(%arg0: memref<2x64xbf16, #tpu.memory_space<vmem>>, %arg1: memref<3x64x128xbf16, #tpu.memory_space<vmem>>, %arg2: memref<3x128xf32, #tpu.memory_space<vmem>>, %arg3: memref<2x128xf32, #tpu.memory_space<vmem>>) attributes {dimension_semantics = [], scalar_prefetch = 0 : i64, scratch_operands = 0 : i64, tpu.core_type = #tpu.core_type<tc>} {
    %c0 = arith.constant 0 : index
    %c0_0 = arith.constant 0 : index
    %0 = vector.load %arg0[%c0, %c0_0] : memref<2x64xbf16, #tpu.memory_space<vmem>>, vector<2x64xbf16>
    %c0_1 = arith.constant 0 : index
    %c0_2 = arith.constant 0 : index
    %c0_3 = arith.constant 0 : index
    %1 = vector.load %arg1[%c0_1, %c0_2, %c0_3] : memref<3x64x128xbf16, #tpu.memory_space<vmem>>, vector<1x64x128xbf16>
    %2 = vector.shape_cast %1 : vector<1x64x128xbf16> to vector<64x128xbf16>
    %cst = arith.constant dense<0.000000e+00> : vector<2x128xf32>
    %3 = tpu.matmul %0, %2, %cst {dimension_numbers = #tpu.dot_dimension_numbers<[1], [0], [0], [1], [0, 0, 1, 1], [], []>} : vector<2x64xbf16>, vector<64x128xbf16>, vector<2x128xf32> -> vector<2x128xf32>
    %4 = vector.extract_strided_slice %3 {offsets = [0, 0], sizes = [2, 64], strides = [1, 1]} : vector<2x128xf32> to vector<2x64xf32>
    %5 = vector.extract_strided_slice %3 {offsets = [0, 64], sizes = [2, 64], strides = [1, 1]} : vector<2x128xf32> to vector<2x64xf32>
    %6 = arith.maximumf %4, %5 : vector<2x64xf32>
    %c0_4 = arith.constant 0 : index
    %c0_5 = arith.constant 0 : index
    %7 = vector.load %arg2[%c0_4, %c0_5] : memref<3x128xf32, #tpu.memory_space<vmem>>, vector<1x64xf32>
    %8 = vector.broadcast %7 : vector<1x64xf32> to vector<2x64xf32>
    %9 = arith.addf %6, %8 : vector<2x64xf32>
    %cst_6 = arith.constant 0.000000e+00 : f32
    %10 = vector.broadcast %cst_6 : f32 to vector<2x64xf32>
    %11 = arith.maximumf %9, %10 : vector<2x64xf32>
    %12 = arith.truncf %11 : vector<2x64xf32> to vector<2x64xbf16>
    %c1 = arith.constant 1 : index
    %c0_7 = arith.constant 0 : index
    %c0_8 = arith.constant 0 : index
    %13 = vector.load %arg1[%c1, %c0_7, %c0_8] : memref<3x64x128xbf16, #tpu.memory_space<vmem>>, vector<1x64x128xbf16>
    %14 = vector.shape_cast %13 : vector<1x64x128xbf16> to vector<64x128xbf16>
    %cst_9 = arith.constant dense<0.000000e+00> : vector<2x128xf32>
    %15 = tpu.matmul %12, %14, %cst_9 {dimension_numbers = #tpu.dot_dimension_numbers<[1], [0], [0], [1], [0, 0, 1, 1], [], []>} : vector<2x64xbf16>, vector<64x128xbf16>, vector<2x128xf32> -> vector<2x128xf32>
    %16 = vector.extract_strided_slice %15 {offsets = [0, 0], sizes = [2, 64], strides = [1, 1]} : vector<2x128xf32> to vector<2x64xf32>
    %17 = vector.extract_strided_slice %15 {offsets = [0, 64], sizes = [2, 64], strides = [1, 1]} : vector<2x128xf32> to vector<2x64xf32>
    %18 = arith.maximumf %16, %17 : vector<2x64xf32>
    %c1_10 = arith.constant 1 : index
    %c0_11 = arith.constant 0 : index
    %19 = vector.load %arg2[%c1_10, %c0_11] : memref<3x128xf32, #tpu.memory_space<vmem>>, vector<1x64xf32>
    %20 = vector.broadcast %19 : vector<1x64xf32> to vector<2x64xf32>
    %21 = arith.addf %18, %20 : vector<2x64xf32>
    %cst_12 = arith.constant 0.000000e+00 : f32
    %22 = vector.broadcast %cst_12 : f32 to vector<2x64xf32>
    %23 = arith.maximumf %21, %22 : vector<2x64xf32>
    %24 = arith.truncf %23 : vector<2x64xf32> to vector<2x64xbf16>
    %c2 = arith.constant 2 : index
    %c0_13 = arith.constant 0 : index
    %c0_14 = arith.constant 0 : index
    %25 = vector.load %arg1[%c2, %c0_13, %c0_14] : memref<3x64x128xbf16, #tpu.memory_space<vmem>>, vector<1x64x128xbf16>
    %26 = vector.shape_cast %25 : vector<1x64x128xbf16> to vector<64x128xbf16>
    %cst_15 = arith.constant dense<0.000000e+00> : vector<2x128xf32>
    %27 = tpu.matmul %24, %26, %cst_15 {dimension_numbers = #tpu.dot_dimension_numbers<[1], [0], [0], [1], [0, 0, 1, 1], [], []>} : vector<2x64xbf16>, vector<64x128xbf16>, vector<2x128xf32> -> vector<2x128xf32>
    %c2_16 = arith.constant 2 : index
    %c0_17 = arith.constant 0 : index
    %28 = vector.load %arg2[%c2_16, %c0_17] : memref<3x128xf32, #tpu.memory_space<vmem>>, vector<1x128xf32>
    %29 = vector.broadcast %28 : vector<1x128xf32> to vector<2x128xf32>
    %30 = arith.addf %27, %29 : vector<2x128xf32>
    %c0_18 = arith.constant 0 : index
    %c0_19 = arith.constant 0 : index
    %31 = vector.load %arg3[%c0_18, %c0_19] : memref<2x128xf32, #tpu.memory_space<vmem>>, vector<2x128xf32>
    tpu.vector_store %arg3[%c0_18, %c0_19], %30 {strides = array<i32>} : memref<2x128xf32, #tpu.memory_space<vmem>>, vector<2x128xf32>,
    return
  }
}

</mosaic_0001>

<llo_original>
// kernel: conv_encoder_forward.1
$region0: #{conv_encoder_forward.1}
  #allocation0 [shape = 'u32[]', space=smem, size = 0x4, offset = 0x4, fixed_abs, tag = 'smem constant byte address 0x4 - core index']
  #allocation1 [shape = 'u32[144,128]{1,0:T(1,128)}', space=vmem, size = 0x12000, scoped, tag = 'internal scratch']
  %s0 = inlined_call_operand.vmem [shape: bf16[2,64], index: 0, kind: input, shape index: {}]
  %s1 = inlined_call_operand.hbm [shape: bf16[3,64,128], index: 1, kind: input, shape index: {}]
  %s2 = inlined_call_operand.vmem [shape: f32[3,128], index: 2, kind: input, shape index: {}]
  %s3 = inlined_call_operand.hbm [shape: f32[2,128], index: 3, kind: output, shape index: {}]
  %s4 = sld [smem:[#allocation0]]
  $region26: #{conv_encoder_forward.1} parent=0
    _
  %s6 = ssub.s32 1, %s4
  %s7 = scalar_select 0, %s6, %s4
  $region1: #{conv_encoder_forward.1} parent=0
    #allocation2 [shape = 'u8[49152]{0}', space=vmem, size = 0xc000, scoped, tag = 'input window, operand 1, single buffered']
    #allocation3 [shape = 's32[1]{0}', space=sflag, size = 0x4, scoped, tag = 'scoped memory for conv_encoder_forward.1']
    #allocation4 [shape = 's32[1]{0}', space=sflag, size = 0x4, scoped, tag = 'scoped memory for conv_encoder_forward.1']
    #allocation5 [shape = 'u8[1024]{0}', space=vmem, size = 0x400, scoped, tag = 'output window, operand 0, single buffered']
    %8 = vsyncpa [#allocation3], 0
    %9 = vsyncpa [#allocation4], 0
    // Predicated region
    $region2: #{conv_encoder_forward.1} parent=1 // pred_check
      _
    $region3: #{conv_encoder_forward.1} parent=1 // pred_check_branch
      %11 = sbr.rel (0) target = $region5
    $region4: #{conv_encoder_forward.1} parent=1 // pred_region
      _
    $region5: #{conv_encoder_forward.1} parent=1 // pred_fallthru
      _
    // Predicated region
    $region6: #{conv_encoder_forward.1} parent=1 // pred_check
      _
    $region7: #{conv_encoder_forward.1} parent=1 // pred_check_branch
      %13 = sbr.rel (0) target = $region9
    $region8: #{conv_encoder_forward.1} parent=1 // pred_region
      %s15 = ssub.s32 1536, 1536
      %16 = vsyncadd [#allocation3], %s15
      %s17 = sshll.u32 [#allocation2], 4
      %s18 = int_to_ptr.vmem [resolvable:$true] %s17
      %23 = dma.hbm_to_vmem [thread:$0]  %s1, 1536, %s18, [#allocation3], 64, 64, 4
    $region9: #{conv_encoder_forward.1} parent=1 // pred_fallthru
      _
    // Predicated region
    $region10: #{conv_encoder_forward.1} parent=1 // pred_check
      _
    $region11: #{conv_encoder_forward.1} parent=1 // pred_check_branch
      %25 = sbr.rel (0) target = $region13
    $region12: #{conv_encoder_forward.1} parent=1 // pred_region
      _
    $region13: #{conv_encoder_forward.1} parent=1 // pred_fallthru
      _
    // Predicated region
    $region14: #{conv_encoder_forward.1} parent=1 // pred_check
      _
    $region15: #{conv_encoder_forward.1} parent=1 // pred_check_branch
      %27 = sbr.rel (0) target = $region17
    $region16: #{conv_encoder_forward.1} parent=1 // pred_region
      %28 = dma.done [#allocation3], 1536
    $region17: #{conv_encoder_forward.1} parent=1 // pred_fallthru
      _
    %v30 = vld [vmem:[%s0] sm:$0x1]
    %v31 = vld [vmem:[#allocation2] sm:$0xf]
    %v32 = vld [vmem:[#allocation2 + $0x4] sm:$0xf]
    %v33 = vld [vmem:[#allocation2 + $0x8] sm:$0xf]
    %v34 = vld [vmem:[#allocation2 + $0xc] sm:$0xf]
    %v35 = vld [vmem:[#allocation2 + $0x10] sm:$0xf]
    %v36 = vld [vmem:[#allocation2 + $0x14] sm:$0xf]
    %v37 = vld [vmem:[#allocation2 + $0x18] sm:$0xf]
    %v38 = vld [vmem:[#allocation2 + $0x1c] sm:$0xf]
    %v47 = vunpack.c.l.b16 %v31
    %v48 = vunpack.c.l.b16 %v32
    %v49 = vunpack.c.l.b16 %v33
    %v50 = vunpack.c.l.b16 %v34
    %v51 = vunpack.c.l.b16 %v35
    %v52 = vunpack.c.l.b16 %v36
    %v53 = vunpack.c.l.b16 %v37
    %v54 = vunpack.c.l.b16 %v38
    %v55 = vpack.c.b16 %v48, %v47
    %v56 = vpack.c.b16 %v50, %v49
    %v57 = vpack.c.b16 %v52, %v51
    %v58 = vpack.c.b16 %v54, %v53
    %vm63 = vcmask 523264
    %v65 = vsel %vm63, %v30, 0
    %67 = vmatprep.subr.bf16.mxu0 0
    %68 = vmatpush1.bf16.msra.mxu0 0
    %69 = vmatprep.subr.bf16.mxu0 0
    %70 = vmatpush1.bf16.msra.mxu0 0
    %71 = vmatprep.subr.bf16.mxu0 0
    %72 = vmatpush1.bf16.msra.mxu0 0
    %73 = vmatprep.subr.bf16.mxu0 0
    %74 = vmatpush1.bf16.msra.mxu0 0
    %75 = vmatprep.subr.bf16.mxu0 0
    %76 = vmatpush1.bf16.msra.mxu0 %v58
    %77 = vmatprep.subr.bf16.mxu0 0
    %78 = vmatpush1.bf16.msra.mxu0 %v57
    %79 = vmatprep.subr.bf16.mxu0 0
    %80 = vmatpush1.bf16.msra.mxu0 %v56
    %81 = vmatprep.subr.bf16.mxu0 0
    %82 = vmatpush1.bf16.msra.mxu0 %v55
    %83 = vmatprep.subr.bf16.mxu0 0
    %84 = vmatpush2.bf16.msra.mxu0 0
    %85 = vmatprep.subr.bf16.mxu0 0
    %86 = vmatpush2.bf16.msra.mxu0 0
    %87 = vmatprep.subr.bf16.mxu0 0
    %88 = vmatpush2.bf16.msra.mxu0 0
    %89 = vmatprep.subr.bf16.mxu0 0
    %90 = vmatpush2.bf16.msra.mxu0 0
    %91 = vmatprep.subr.bf16.mxu0 0
    %92 = vmatpush2.bf16.msra.mxu0 0
    %93 = vmatprep.subr.bf16.mxu0 0
    %94 = vmatpush2.bf16.msra.mxu0 0
    %95 = vmatprep.subr.bf16.mxu0 0
    %96 = vmatpush2.bf16.msra.mxu0 0
    %97 = vmatprep.subr.bf16.mxu0 0
    %98 = vmatpush2.bf16.msra.mxu0 0
    %99 = vmatprep.mubr.bf16.mxu0 0
    %100 = vmatmul.mubr.bf16.gmra.mxu0 %v65
    %v101 = vpop.f32.mrf.mxu0
    %v102 = vadd.f32 0.0, %v101
    %v103 = vpop.f32.mrf.mxu0
    %v104 = vpop.f32.mrf.mxu0
    %v105 = vpop.f32.mrf.mxu0
    %106 = vdwg.mxu0
    %108 = vrot.lane.b32.xlu0 %v102, 64
    %v109 = vpop.permute.xlu0 %108
    %v111 = vmax.f32 %v102, %v109
    %v112 = vld [vmem:[%s2] sm:$0x1]
    %v113 = vlaneseq
    %v114 = vshrl.u32 %v113, 7
    %v115 = vsub.s32 0, %v114
    %v116 = vrot.slane %v112, %v115
    %v117 = vadd.f32 %v111, %v116
    %v118 = vmax.f32 %v117, 0.0
    %v119 = vpack.c.bf16 %v118, %v118
    %s120 = scalar_lea.vmem [#allocation2], 32
    %v121 = vld [vmem:[%s120] sm:$0xf]
    %v122 = vld [vmem:[%s120 + $0x4] sm:$0xf]
    %v123 = vld [vmem:[%s120 + $0x8] sm:$0xf]
    %v124 = vld [vmem:[%s120 + $0xc] sm:$0xf]
    %v125 = vld [vmem:[%s120 + $0x10] sm:$0xf]
    %v126 = vld [vmem:[%s120 + $0x14] sm:$0xf]
    %v127 = vld [vmem:[%s120 + $0x18] sm:$0xf]
    %v128 = vld [vmem:[%s120 + $0x1c] sm:$0xf]
    %v137 = vunpack.c.l.b16 %v121
    %v138 = vunpack.c.l.b16 %v122
    %v139 = vunpack.c.l.b16 %v123
    %v140 = vunpack.c.l.b16 %v124
    %v141 = vunpack.c.l.b16 %v125
    %v142 = vunpack.c.l.b16 %v126
    %v143 = vunpack.c.l.b16 %v127
    %v144 = vunpack.c.l.b16 %v128
    %v145 = vpack.c.b16 %v138, %v137
    %v146 = vpack.c.b16 %v140, %v139
    %v147 = vpack.c.b16 %v142, %v141
    %v148 = vpack.c.b16 %v144, %v143
    %v154 = vsel %vm63, %v119, 0
    %156 = vmatprep.subr.bf16.mxu0 0
    %157 = vmatpush1.bf16.msra.mxu0 0
    %158 = vmatprep.subr.bf16.mxu0 0
    %159 = vmatpush1.bf16.msra.mxu0 0
    %160 = vmatprep.subr.bf16.mxu0 0
    %161 = vmatpush1.bf16.msra.mxu0 0
    %162 = vmatprep.subr.bf16.mxu0 0
    %163 = vmatpush1.bf16.msra.mxu0 0
    %164 = vmatprep.subr.bf16.mxu0 0
    %165 = vmatpush1.bf16.msra.mxu0 %v148
    %166 = vmatprep.subr.bf16.mxu0 0
    %167 = vmatpush1.bf16.msra.mxu0 %v147
    %168 = vmatprep.subr.bf16.mxu0 0
    %169 = vmatpush1.bf16.msra.mxu0 %v146
    %170 = vmatprep.subr.bf16.mxu0 0
    %171 = vmatpush1.bf16.msra.mxu0 %v145
    %172 = vmatprep.subr.bf16.mxu0 0
    %173 = vmatpush2.bf16.msra.mxu0 0
    %174 = vmatprep.subr.bf16.mxu0 0
    %175 = vmatpush2.bf16.msra.mxu0 0
    %176 = vmatprep.subr.bf16.mxu0 0
    %177 = vmatpush2.bf16.msra.mxu0 0
    %178 = vmatprep.subr.bf16.mxu0 0
    %179 = vmatpush2.bf16.msra.mxu0 0
    %180 = vmatprep.subr.bf16.mxu0 0
    %181 = vmatpush2.bf16.msra.mxu0 0
    %182 = vmatprep.subr.bf16.mxu0 0
    %183 = vmatpush2.bf16.msra.mxu0 0
    %184 = vmatprep.subr.bf16.mxu0 0
    %185 = vmatpush2.bf16.msra.mxu0 0
    %186 = vmatprep.subr.bf16.mxu0 0
    %187 = vmatpush2.bf16.msra.mxu0 0
    %188 = vmatprep.mubr.bf16.mxu0 0
    %189 = vmatmul.mubr.bf16.gmra.mxu0 %v154
    %v190 = vpop.f32.mrf.mxu0
    %v191 = vadd.f32 0.0, %v190
    %v192 = vpop.f32.mrf.mxu0
    %v193 = vpop.f32.mrf.mxu0
    %v194 = vpop.f32.mrf.mxu0
    %195 = vdwg.mxu0
    %197 = vrot.lane.b32.xlu0 %v191, 64
    %v198 = vpop.permute.xlu0 %197
    %v200 = vmax.f32 %v191, %v198
    %v201 = vld [vmem:[%s2 + $0x1] sm:$0x1]
    %v202 = vlaneseq
    %v203 = vshrl.u32 %v202, 7
    %v204 = vsub.s32 0, %v203
    %v205 = vrot.slane %v201, %v204
    %v206 = vadd.f32 %v200, %v205
    %v207 = vmax.f32 %v206, 0.0
    %v208 = vpack.c.bf16 %v207, %v207
    %s209 = scalar_lea.vmem [#allocation2], 64
    %v210 = vld [vmem:[%s209] sm:$0xf]
    %v211 = vld [vmem:[%s209 + $0x4] sm:$0xf]
    %v212 = vld [vmem:[%s209 + $0x8] sm:$0xf]
    %v213 = vld [vmem:[%s209 + $0xc] sm:$0xf]
    %v214 = vld [vmem:[%s209 + $0x10] sm:$0xf]
    %v215 = vld [vmem:[%s209 + $0x14] sm:$0xf]
    %v216 = vld [vmem:[%s209 + $0x18] sm:$0xf]
    %v217 = vld [vmem:[%s209 + $0x1c] sm:$0xf]
    %v218 = vld [vmem:[%s2 + $0x2] sm:$0x1]
    %v219 = vlaneseq
    %v220 = vshrl.u32 %v219, 7
    %v221 = vsub.s32 0, %v220
    %v222 = vrot.slane %v218, %v221
    %v231 = vunpack.c.l.b16 %v210
    %v232 = vunpack.c.l.b16 %v211
    %v233 = vunpack.c.l.b16 %v212
    %v234 = vunpack.c.l.b16 %v213
    %v235 = vunpack.c.l.b16 %v214
    %v236 = vunpack.c.l.b16 %v215
    %v237 = vunpack.c.l.b16 %v216
    %v238 = vunpack.c.l.b16 %v217
    %v239 = vpack.c.b16 %v232, %v231
    %v240 = vpack.c.b16 %v234, %v233
    %v241 = vpack.c.b16 %v236, %v235
    %v242 = vpack.c.b16 %v238, %v237
    %v248 = vsel %vm63, %v208, 0
    %250 = vmatprep.subr.bf16.mxu0 0
    %251 = vmatpush1.bf16.msra.mxu0 0
    %252 = vmatprep.subr.bf16.mxu0 0
    %253 = vmatpush1.bf16.msra.mxu0 0
    %254 = vmatprep.subr.bf16.mxu0 0
    %255 = vmatpush1.bf16.msra.mxu0 0
    %256 = vmatprep.subr.bf16.mxu0 0
    %257 = vmatpush1.bf16.msra.mxu0 0
    %258 = vmatprep.subr.bf16.mxu0 0
    %259 = vmatpush1.bf16.msra.mxu0 %v242
    %260 = vmatprep.subr.bf16.mxu0 0
    %261 = vmatpush1.bf16.msra.mxu0 %v241
    %262 = vmatprep.subr.bf16.mxu0 0
    %263 = vmatpush1.bf16.msra.mxu0 %v240
    %264 = vmatprep.subr.bf16.mxu0 0
    %265 = vmatpush1.bf16.msra.mxu0 %v239
    %266 = vmatprep.subr.bf16.mxu0 0
    %267 = vmatpush2.bf16.msra.mxu0 0
    %268 = vmatprep.subr.bf16.mxu0 0
    %269 = vmatpush2.bf16.msra.mxu0 0
    %270 = vmatprep.subr.bf16.mxu0 0
    %271 = vmatpush2.bf16.msra.mxu0 0
    %272 = vmatprep.subr.bf16.mxu0 0
    %273 = vmatpush2.bf16.msra.mxu0 0
    %274 = vmatprep.subr.bf16.mxu0 0
    %275 = vmatpush2.bf16.msra.mxu0 0
    %276 = vmatprep.subr.bf16.mxu0 0
    %277 = vmatpush2.bf16.msra.mxu0 0
    %278 = vmatprep.subr.bf16.mxu0 0
    %279 = vmatpush2.bf16.msra.mxu0 0
    %280 = vmatprep.subr.bf16.mxu0 0
    %281 = vmatpush2.bf16.msra.mxu0 0
    %282 = vmatprep.mubr.bf16.mxu0 0
    %283 = vmatmul.mubr.bf16.gmra.mxu0 %v248
    %v284 = vpop.f32.mrf.mxu0
    %v285 = vadd.f32 %v222, %v284
    %v286 = vpop.f32.mrf.mxu0
    %v287 = vpop.f32.mrf.mxu0
    %v288 = vpop.f32.mrf.mxu0
    %289 = vdwg.mxu0
    %290 = vst [vmem:[#allocation5] sm:$0x3] %v285
    // Predicated region
    $region18: #{conv_encoder_forward.1} parent=1 // pred_check
      _
    $region19: #{conv_encoder_forward.1} parent=1 // pred_check_branch
      %292 = sbr.rel (0) target = $region21
    $region20: #{conv_encoder_forward.1} parent=1 // pred_region
      %s294 = ssub.s32 32, 32
      %295 = vsyncadd [#allocation4], %s294
      %s297 = sshll.u32 [#allocation5], 4
      %s298 = int_to_ptr.vmem [resolvable:$true] %s297
      %300 = dma.vmem_to_hbm [thread:$0]  %s298, 32, %s3, [#allocation4]
    $region21: #{conv_encoder_forward.1} parent=1 // pred_fallthru
      _
    // Predicated region
    $region22: #{conv_encoder_forward.1} parent=1 // pred_check
      _
    $region23: #{conv_encoder_forward.1} parent=1 // pred_check_branch
      %302 = sbr.rel (0) target = $region25
    $region24: #{conv_encoder_forward.1} parent=1 // pred_region
      %303 = dma.done [#allocation4], 32
    $region25: #{conv_encoder_forward.1} parent=1 // pred_fallthru
      _
    %304 = vsyncpa [#allocation3], 1
    %305 = vsyncpa [#allocation4], 1

</llo_original>
